<compile_context>
chip_gen: v6e
topology: v6e:2x2x1
jax: 0.10.0
libtpu: 0.0.40
codegen_flags: <defaults>
</compile_context>

<pallas_src>
import jax
import jax.numpy as jnp
from jax import lax
from jax.experimental import pallas as pl
from jax.experimental.pallas import tpu as pltpu

_LANES = 128
_SUBLANES = 8
_TARGET_BLOCK_BYTES = 4 * 1024 * 1024     # per input, per grid step (double-buffered)
_VMEM_LIMIT_BYTES = 40 * 1024 * 1024      # 24 MiB of buffers + headroom; < 64 MiB (v7x)


def _cores_per_chip():
    """2 TensorCores per chip on v7x-like devices, else 1 (v5e/v6e)."""
    try:
        kind = (getattr(jax.devices()[0], "device_kind", "") or "").lower()
        if "7" in kind:
            return 2
    except Exception:
        pass
    return 1


def _make_bce_kernel(tm, m_rows, num_blocks, bpc, num_splits):
    # Does any grid block see rows not backed by real data (partial last block
    # or duplicated clamped block)?  Decided at trace time.
    any_tail = (num_splits * bpc * tm) > m_rows

    def _accumulate(yt, yp, w, num_ref, den_ref):
        eps = jnp.float32(1e-07)
        one = jnp.float32(1.0)
        yp = jnp.float32(1.0 - 2.0 * 1e-07) * yp + eps
        lp = jnp.log(yp)
        lq = jnp.log(one - yp)
        # == -(yt*log(yp) + (1-yt)*log(1-yp)), with fewer VALU ops.
        bce = w * (yt * (lq - lp) - lq)
        # (tm,128) -> (tm//8, 8, 128); leading-axis sum = plain VPU vreg adds.
        num_ref[...] += jnp.sum(
            bce.reshape(tm // _SUBLANES, _SUBLANES, _LANES), axis=0)
        den_ref[...] += jnp.sum(
            w.reshape(tm // _SUBLANES, _SUBLANES, _LANES), axis=0)

    def kernel(yt_ref, yp_ref, w_ref, num_ref, den_ref):
        c = pl.program_id(0)
        j = pl.program_id(1)

        @pl.when(j == 0)
        def _():
            num_ref[...] = jnp.zeros_like(num_ref)
            den_ref[...] = jnp.zeros_like(den_ref)

        def load():
            return (yt_ref[...].astype(jnp.float32),
                    yp_ref[...].astype(jnp.float32),
                    w_ref[...].astype(jnp.float32))

        if not any_tail:
            yt, yp, w = load()
            _accumulate(yt, yp, w, num_ref, den_ref)
        else:
            linear = c * bpc + j
            is_tail = (linear + 1) * tm > m_rows

            @pl.when(jnp.logical_not(is_tail))
            def _():
                yt, yp, w = load()
                _accumulate(yt, yp, w, num_ref, den_ref)

            @pl.when(is_tail)
            def _():
                yt, yp, w = load()
                # (tm,1) row iota compared against a scalar; lanes broadcast.
                rows_left = m_rows - linear * tm    # <= 0 for duplicated blocks
                row = lax.broadcasted_iota(jnp.int32, (tm, 1), 0)
                valid = row < rows_left
                yt = jnp.where(valid, yt, jnp.float32(0.0))
                yp = jnp.where(valid, yp, jnp.float32(0.5))   # safe log argument
                w = jnp.where(valid, w, jnp.float32(0.0))
                _accumulate(yt, yp, w, num_ref, den_ref)

    return kernel


def bce_loss(y_true, y_pred, weight):
    """Matches BCE_loss.forward(y_true, y_pred, weight)."""
    total = int(y_true.size)
    pad = (-total) % _LANES                 # only for sizes not divisible by 128
    padded_total = total + pad
    m_rows = padded_total // _LANES

    def prep(x):
        if x.dtype not in (jnp.float32, jnp.bfloat16):
            x = x.astype(jnp.float32)
        flat = x.reshape(-1)                # layout-preserving view, no copy
        if pad:
            # Rare (<128 elements): padded entries carry w=0 and yp->eps, so
            # they contribute exactly 0 to both sums.
            flat = jnp.pad(flat, (0, pad))
        return flat.reshape(m_rows, _LANES)

    yt2, yp2, w2 = prep(y_true), prep(y_pred), prep(weight)

    # Block rows chosen by bytes: ~4 MiB per input per step.
    itemsize = max(yt2.dtype.itemsize, yp2.dtype.itemsize, w2.dtype.itemsize)
    tm_cap = max(_SUBLANES,
                 (_TARGET_BLOCK_BYTES // (_LANES * itemsize))
                 // _SUBLANES * _SUBLANES)
    rows_rounded = -(-m_rows // _SUBLANES) * _SUBLANES   # multiple of 8
    tm = min(tm_cap, rows_rounded)

    num_blocks = -(-m_rows // tm)
    num_splits = _cores_per_chip()
    if num_blocks < num_splits:
        num_splits = 1
    bpc = -(-num_blocks // num_splits)      # blocks per core-split
    clamp_needed = (num_splits * bpc != num_blocks)

    def in_map(c, j):
        linear = c * bpc + j
        if clamp_needed:
            # Keep the DMA in-bounds for the duplicated block; it is fully
            # masked out inside the kernel.
            linear = jnp.minimum(linear, num_blocks - 1)
        return (linear, 0)

    in_spec = pl.BlockSpec((tm, _LANES), in_map)
    out_spec = pl.BlockSpec((_SUBLANES, _LANES), lambda c, j: (c, 0))
    out_shape = jax.ShapeDtypeStruct((num_splits * _SUBLANES, _LANES),
                                     jnp.float32)

    if num_splits > 1:
        dims = (getattr(pltpu, "CORE_PARALLEL", "parallel"),
                getattr(pltpu, "ARBITRARY", "arbitrary"))
    else:
        dims = ("arbitrary", "arbitrary")

    bytes_accessed = padded_total * (yt2.dtype.itemsize + yp2.dtype.itemsize
                                     + w2.dtype.itemsize) \
        + 2 * num_splits * _SUBLANES * _LANES * 4
    cost = pl.CostEstimate(flops=10 * padded_total,
                           transcendentals=2 * padded_total,
                           bytes_accessed=bytes_accessed)

    num_out, den_out = pl.pallas_call(
        _make_bce_kernel(tm, m_rows, num_blocks, bpc, num_splits),
        out_shape=(out_shape, out_shape),
        grid_spec=pltpu.PrefetchScalarGridSpec(
            num_scalar_prefetch=0,
            grid=(num_splits, bpc),
            in_specs=[in_spec, in_spec, in_spec],
            out_specs=[out_spec, out_spec],
        ),
        compiler_params=pltpu.CompilerParams(
            dimension_semantics=dims,
            vmem_limit_bytes=_VMEM_LIMIT_BYTES,
        ),
        cost_estimate=cost,
    )(yt2, yp2, w2)

    # Tiny (num_splits*8,128) reductions + final divide run as plain XLA ops.
    return jnp.sum(num_out) / jnp.sum(den_out)


def bce_loss_ref(y_true, y_pred, weight):
    epsilon = 1e-07
    y_pred = (1 - 2 * epsilon) * y_pred + epsilon
    total = jnp.sum((-y_true * jnp.log(y_pred)
                     - (1 - y_true) * jnp.log(1 - y_pred)) * weight)
    return total / jnp.sum(weight)


if __name__ == "__main__":
    key = jax.random.PRNGKey(0)
    k1, k2, k3 = jax.random.split(key, 3)
    shape = (2, 4, 16, 16)
    y_true = (jax.random.uniform(k1, shape) > 0.5).astype(jnp.float32)
    y_pred = jax.random.uniform(k2, shape, minval=0.01, maxval=0.99).astype(jnp.float32)
    weight = jax.random.uniform(k3, shape, minval=0.1, maxval=1.0).astype(jnp.float32)

    out = jax.block_until_ready(bce_loss(y_true, y_pred, weight))
    ref = bce_loss_ref(y_true, y_pred, weight)
    assert jnp.allclose(out, ref, rtol=1e-5, atol=1e-5), (out, ref)
    print("KERNEL_OK")
</pallas_src>

<mosaic_0001>
module attributes {stable_mosaic.version = 11 : i64} {
  func.func @kernel(%arg0: i32, %arg1: i32, %arg2: memref<16x128xf32, #tpu.memory_space<vmem>>, %arg3: memref<16x128xf32, #tpu.memory_space<vmem>>, %arg4: memref<16x128xf32, #tpu.memory_space<vmem>>, %arg5: memref<8x128xf32, #tpu.memory_space<vmem>>, %arg6: memref<8x128xf32, #tpu.memory_space<vmem>>) attributes {dimension_semantics = [#tpu.dimension_semantics<arbitrary>, #tpu.dimension_semantics<arbitrary>], iteration_bounds = array<i64: 1, 1>, scalar_prefetch = 0 : i64, scratch_operands = 0 : i64, tpu.core_type = #tpu.core_type<tc>, window_params = [{transform_indices = @transform_0, window_bounds = array<i64: 16, 128>}, {transform_indices = @transform_1, window_bounds = array<i64: 16, 128>}, {transform_indices = @transform_2, window_bounds = array<i64: 16, 128>}, {transform_indices = @transform_3, window_bounds = array<i64: 8, 128>}, {transform_indices = @transform_4, window_bounds = array<i64: 8, 128>}]} {
    %c0_i32 = arith.constant 0 : i32
    %0 = arith.cmpi eq, %arg1, %c0_i32 : i32
    %1 = arith.extui %0 : i1 to i32
    %c0_i32_0 = arith.constant 0 : i32
    %2 = arith.cmpi ne, %1, %c0_i32_0 : i32
    scf.if %2 {
      %cst_18 = arith.constant 0.000000e+00 : f32
      %28 = vector.broadcast %cst_18 : f32 to vector<8x128xf32>
      %c0_19 = arith.constant 0 : index
      %c0_20 = arith.constant 0 : index
      %29 = vector.load %arg5[%c0_19, %c0_20] : memref<8x128xf32, #tpu.memory_space<vmem>>, vector<8x128xf32>
      tpu.vector_store %arg5[%c0_19, %c0_20], %28 {strides = array<i32>} : memref<8x128xf32, #tpu.memory_space<vmem>>, vector<8x128xf32>,
      %cst_21 = arith.constant 0.000000e+00 : f32
      %30 = vector.broadcast %cst_21 : f32 to vector<8x128xf32>
      %c0_22 = arith.constant 0 : index
      %c0_23 = arith.constant 0 : index
      %31 = vector.load %arg6[%c0_22, %c0_23] : memref<8x128xf32, #tpu.memory_space<vmem>>, vector<8x128xf32>
      tpu.vector_store %arg6[%c0_22, %c0_23], %30 {strides = array<i32>} : memref<8x128xf32, #tpu.memory_space<vmem>>, vector<8x128xf32>,
    } else {
    }
    %c0 = arith.constant 0 : index
    %c0_1 = arith.constant 0 : index
    %3 = vector.load %arg2[%c0, %c0_1] : memref<16x128xf32, #tpu.memory_space<vmem>>, vector<16x128xf32>
    %c0_2 = arith.constant 0 : index
    %c0_3 = arith.constant 0 : index
    %4 = vector.load %arg3[%c0_2, %c0_3] : memref<16x128xf32, #tpu.memory_space<vmem>>, vector<16x128xf32>
    %c0_4 = arith.constant 0 : index
    %c0_5 = arith.constant 0 : index
    %5 = vector.load %arg4[%c0_4, %c0_5] : memref<16x128xf32, #tpu.memory_space<vmem>>, vector<16x128xf32>
    %cst = arith.constant 0.999999821 : f32
    %6 = vector.broadcast %cst : f32 to vector<16x128xf32>
    %7 = arith.mulf %6, %4 : vector<16x128xf32>
    %cst_6 = arith.constant 1.000000e-07 : f32
    %8 = vector.broadcast %cst_6 : f32 to vector<16x128xf32>
    %9 = arith.addf %7, %8 : vector<16x128xf32>
    %10 = math.log %9 : vector<16x128xf32>
    %cst_7 = arith.constant 1.000000e+00 : f32
    %11 = vector.broadcast %cst_7 : f32 to vector<16x128xf32>
    %12 = arith.subf %11, %9 : vector<16x128xf32>
    %13 = math.log %12 : vector<16x128xf32>
    %14 = arith.subf %13, %10 : vector<16x128xf32>
    %15 = arith.mulf %3, %14 : vector<16x128xf32>
    %16 = arith.subf %15, %13 : vector<16x128xf32>
    %17 = arith.mulf %5, %16 : vector<16x128xf32>
    %c0_8 = arith.constant 0 : index
    %c0_9 = arith.constant 0 : index
    %18 = vector.load %arg5[%c0_8, %c0_9] : memref<8x128xf32, #tpu.memory_space<vmem>>, vector<8x128xf32>
    %19 = vector.shape_cast %17 : vector<16x128xf32> to vector<2x8x128xf32>
    %cst_10 = arith.constant dense<0.000000e+00> : vector<8x128xf32>
    %20 = vector.multi_reduction <add>, %19, %cst_10 [0] : vector<2x8x128xf32> to vector<8x128xf32>
    %21 = arith.addf %18, %20 : vector<8x128xf32>
    %c0_11 = arith.constant 0 : index
    %c0_12 = arith.constant 0 : index
    %22 = vector.load %arg5[%c0_11, %c0_12] : memref<8x128xf32, #tpu.memory_space<vmem>>, vector<8x128xf32>
    tpu.vector_store %arg5[%c0_11, %c0_12], %21 {strides = array<i32>} : memref<8x128xf32, #tpu.memory_space<vmem>>, vector<8x128xf32>,
    %c0_13 = arith.constant 0 : index
    %c0_14 = arith.constant 0 : index
    %23 = vector.load %arg6[%c0_13, %c0_14] : memref<8x128xf32, #tpu.memory_space<vmem>>, vector<8x128xf32>
    %24 = vector.shape_cast %5 : vector<16x128xf32> to vector<2x8x128xf32>
    %cst_15 = arith.constant dense<0.000000e+00> : vector<8x128xf32>
    %25 = vector.multi_reduction <add>, %24, %cst_15 [0] : vector<2x8x128xf32> to vector<8x128xf32>
    %26 = arith.addf %23, %25 : vector<8x128xf32>
    %c0_16 = arith.constant 0 : index
    %c0_17 = arith.constant 0 : index
    %27 = vector.load %arg6[%c0_16, %c0_17] : memref<8x128xf32, #tpu.memory_space<vmem>>, vector<8x128xf32>
    tpu.vector_store %arg6[%c0_16, %c0_17], %26 {strides = array<i32>} : memref<8x128xf32, #tpu.memory_space<vmem>>, vector<8x128xf32>,
    return
  }
  func.func @transform_0(%arg0: i32, %arg1: i32) -> (i32, i32) {
    %c1_i32 = arith.constant 1 : i32
    %0 = arith.muli %arg0, %c1_i32 : i32
    %1 = arith.addi %0, %arg1 : i32
    %c0_i32 = arith.constant 0 : i32
    %c0_i32_0 = arith.constant 0 : i32
    return %1, %c0_i32 : i32, i32
  }
  func.func @transform_1(%arg0: i32, %arg1: i32) -> (i32, i32) {
    %c1_i32 = arith.constant 1 : i32
    %0 = arith.muli %arg0, %c1_i32 : i32
    %1 = arith.addi %0, %arg1 : i32
    %c0_i32 = arith.constant 0 : i32
    %c0_i32_0 = arith.constant 0 : i32
    return %1, %c0_i32 : i32, i32
  }
  func.func @transform_2(%arg0: i32, %arg1: i32) -> (i32, i32) {
    %c1_i32 = arith.constant 1 : i32
    %0 = arith.muli %arg0, %c1_i32 : i32
    %1 = arith.addi %0, %arg1 : i32
    %c0_i32 = arith.constant 0 : i32
    %c0_i32_0 = arith.constant 0 : i32
    return %1, %c0_i32 : i32, i32
  }
  func.func @transform_3(%arg0: i32, %arg1: i32) -> (i32, i32) {
    %c0_i32 = arith.constant 0 : i32
    %c0_i32_0 = arith.constant 0 : i32
    return %arg0, %c0_i32 : i32, i32
  }
  func.func @transform_4(%arg0: i32, %arg1: i32) -> (i32, i32) {
    %c0_i32 = arith.constant 0 : i32
    %c0_i32_0 = arith.constant 0 : i32
    return %arg0, %c0_i32 : i32, i32
  }
}

</mosaic_0001>

<llo_original>
// kernel: tpu_custom_call.1
$region0: #{tpu_custom_call.1}
  #allocation0 [shape = 'u32[]', space=smem, size = 0x4, offset = 0x4, fixed_abs, tag = 'smem constant byte address 0x4 - core index']
  #allocation1 [shape = 'u32[144,128]{1,0:T(1,128)}', space=vmem, size = 0x12000, scoped, tag = 'internal scratch']
  %s0 = inlined_call_operand.hbm [shape: f32[16,128], index: 0, kind: input, shape index: {}]
  %s1 = inlined_call_operand.hbm [shape: f32[16,128], index: 1, kind: input, shape index: {}]
  %s2 = inlined_call_operand.hbm [shape: f32[16,128], index: 2, kind: input, shape index: {}]
  %s3 = inlined_call_operand.hbm [shape: f32[8,128], index: 3, kind: output, shape index: {0}]
  %s4 = inlined_call_operand.hbm [shape: f32[8,128], index: 4, kind: output, shape index: {1}]
  %5 = xla_tuple %s3, %s4
  %s6 = sld [smem:[#allocation0]]
  $region46: #{tpu_custom_call.1} parent=0
    _
  %s8 = ssub.s32 1, %s6
  %s9 = scalar_select 0, %s8, %s6
  $region1: #{tpu_custom_call.1} parent=0
    #allocation2 [shape = 'u8[8192]{0}', space=vmem, size = 0x2000, scoped, tag = 'input window, operand 0, single buffered']
    #allocation3 [shape = 's32[1]{0}', space=sflag, size = 0x4, scoped, tag = 'scoped memory for tpu_custom_call.1']
    #allocation4 [shape = 's32[1]{0}', space=sflag, size = 0x4, scoped, tag = 'scoped memory for tpu_custom_call.1']
    #allocation5 [shape = 'u8[8192]{0}', space=vmem, size = 0x2000, scoped, tag = 'input window, operand 1, single buffered']
    #allocation6 [shape = 's32[1]{0}', space=sflag, size = 0x4, scoped, tag = 'scoped memory for tpu_custom_call.1']
    #allocation7 [shape = 'u8[8192]{0}', space=vmem, size = 0x2000, scoped, tag = 'input window, operand 2, single buffered']
    #allocation8 [shape = 'u8[4096]{0}', space=vmem, size = 0x1000, scoped, tag = 'output window, operand 0, single buffered']
    #allocation9 [shape = 'u8[4096]{0}', space=vmem, size = 0x1000, scoped, tag = 'output window, operand 1, single buffered']
    #allocation10 [shape = 's32[1]{0}', space=sflag, size = 0x4, scoped, tag = 'scoped memory for tpu_custom_call.1']
    %10 = vsyncpa [#allocation3], 0
    %11 = vsyncpa [#allocation6], 0
    %12 = vsyncpa [#allocation4], 0
    %13 = vsyncpa [#allocation10], 0
    // Predicated region
    $region2: #{tpu_custom_call.1} parent=1 // pred_check
      _
    $region3: #{tpu_custom_call.1} parent=1 // pred_check_branch
      %15 = sbr.rel (0) target = $region5
    $region4: #{tpu_custom_call.1} parent=1 // pred_region
      %s16 = sadd.s32 0, 0
      %s17 = smul.u32 2, %s16
      %s19 = ssub.s32 256, 256
      %20 = vsyncadd [#allocation3], %s19
      %s21 = smul.addr %s17, 128
      %s22 = scalar_lea.hbm %s0, %s21
      %s23 = sshll.u32 [#allocation2], 4
      %s24 = int_to_ptr.vmem [resolvable:$true] %s23
      %29 = dma.hbm_to_vmem [thread:$0]  %s22, 256, %s24, [#allocation3], 128, 128, 8
    $region5: #{tpu_custom_call.1} parent=1 // pred_fallthru
      _
    // Predicated region
    $region6: #{tpu_custom_call.1} parent=1 // pred_check
      _
    $region7: #{tpu_custom_call.1} parent=1 // pred_check_branch
      %31 = sbr.rel (0) target = $region9
    $region8: #{tpu_custom_call.1} parent=1 // pred_region
      %s32 = sadd.s32 0, 0
      %s33 = smul.u32 2, %s32
      %s35 = ssub.s32 256, 256
      %36 = vsyncadd [#allocation6], %s35
      %s37 = smul.addr %s33, 128
      %s38 = scalar_lea.hbm %s1, %s37
      %s39 = sshll.u32 [#allocation5], 4
      %s40 = int_to_ptr.vmem [resolvable:$true] %s39
      %45 = dma.hbm_to_vmem [thread:$0]  %s38, 256, %s40, [#allocation6], 128, 128, 8
    $region9: #{tpu_custom_call.1} parent=1 // pred_fallthru
      _
    // Predicated region
    $region10: #{tpu_custom_call.1} parent=1 // pred_check
      _
    $region11: #{tpu_custom_call.1} parent=1 // pred_check_branch
      %47 = sbr.rel (0) target = $region13
    $region12: #{tpu_custom_call.1} parent=1 // pred_region
      %s48 = sadd.s32 0, 0
      %s49 = smul.u32 2, %s48
      %s51 = ssub.s32 256, 256
      %52 = vsyncadd [#allocation6], %s51
      %s53 = smul.addr %s49, 128
      %s54 = scalar_lea.hbm %s2, %s53
      %s55 = sshll.u32 [#allocation7], 4
      %s56 = int_to_ptr.vmem [resolvable:$true] %s55
      %61 = dma.hbm_to_vmem [thread:$0]  %s54, 256, %s56, [#allocation6], 128, 128, 8
    $region13: #{tpu_custom_call.1} parent=1 // pred_fallthru
      _
    // Predicated region
    $region14: #{tpu_custom_call.1} parent=1 // pred_check
      _
    $region15: #{tpu_custom_call.1} parent=1 // pred_check_branch
      %63 = sbr.rel (0) target = $region17
    $region16: #{tpu_custom_call.1} parent=1 // pred_region
      %64 = dma.done [#allocation3], 256
    $region17: #{tpu_custom_call.1} parent=1 // pred_fallthru
      _
    // Predicated region
    $region18: #{tpu_custom_call.1} parent=1 // pred_check
      _
    $region19: #{tpu_custom_call.1} parent=1 // pred_check_branch
      %66 = sbr.rel (0) target = $region21
    $region20: #{tpu_custom_call.1} parent=1 // pred_region
      %67 = dma.done [#allocation6], 256
    $region21: #{tpu_custom_call.1} parent=1 // pred_fallthru
      _
    // Predicated region
    $region22: #{tpu_custom_call.1} parent=1 // pred_check
      _
    $region23: #{tpu_custom_call.1} parent=1 // pred_check_branch
      %69 = sbr.rel (0) target = $region25
    $region24: #{tpu_custom_call.1} parent=1 // pred_region
      %70 = dma.done [#allocation6], 256
    $region25: #{tpu_custom_call.1} parent=1 // pred_fallthru
      _
    %s71 = sadd.s32 0, 0
    %s72 = smul.u32 2, %s71
    %s73 = sadd.s32 0, 0
    %s74 = smul.u32 2, %s73
    %s75 = sadd.s32 0, 0
    %s76 = smul.u32 2, %s75
    %p77 = scmp.eq.s32.totalorder 0, 0
    // Predicated region
    $region26: #{tpu_custom_call.1} parent=1 // pred_check
      %p78 = pneg %p77
    $region27: #{tpu_custom_call.1} parent=1 // pred_check_branch
      %80 = sbr.rel (%p78) target = $region29
    $region28: #{tpu_custom_call.1} parent=1 // pred_region
      %81 = vst [vmem:[#allocation8] sm:$0xff] 0.0
      %82 = vst [vmem:[#allocation9] sm:$0xff] 0.0
    $region29: #{tpu_custom_call.1} parent=1 // pred_fallthru
      _
    %v83 = vld [vmem:[#allocation2] sm:$0xff]
    %v84 = vld [vmem:[#allocation2 + $0x8] sm:$0xff]
    %v85 = vld [vmem:[#allocation5] sm:$0xff]
    %v86 = vld [vmem:[#allocation5 + $0x8] sm:$0xff]
    %v87 = vld [vmem:[#allocation7] sm:$0xff]
    %v88 = vld [vmem:[#allocation7 + $0x8] sm:$0xff]
    %v89 = vmul.f32 %v85, 0.9999998
    %v90 = vmul.f32 %v86, 0.9999998
    %v91 = vadd.f32 %v89, 1e-07
    %v92 = vadd.f32 %v90, 1e-07
    %v93 = vlog2.pop %v91
    %v94 = vmul.f32 %v93, 0.6931472
    %v95 = vlog2.pop %v92
    %v96 = vmul.f32 %v95, 0.6931472
    %v97 = vsub.f32 1.0, %v91
    %v98 = vsub.f32 1.0, %v92
    %v99 = vlog2.pop %v97
    %v100 = vmul.f32 %v99, 0.6931472
    %v101 = vlog2.pop %v98
    %v102 = vmul.f32 %v101, 0.6931472
    %v103 = vsub.f32 %v100, %v94
    %v104 = vsub.f32 %v102, %v96
    %v105 = vmul.f32 %v83, %v103
    %v106 = vmul.f32 %v84, %v104
    %v107 = vsub.f32 %v105, %v100
    %v108 = vsub.f32 %v106, %v102
    %v109 = vmul.f32 %v87, %v107
    %v110 = vmul.f32 %v88, %v108
    %v111 = vld [vmem:[#allocation8] sm:$0xff]
    %v112 = vadd.f32 %v109, %v110
    %v113 = vadd.f32 %v111, %v112
    %114 = vst [vmem:[#allocation8] sm:$0xff] %v113
    %v115 = vld [vmem:[#allocation9] sm:$0xff]
    %v116 = vadd.f32 %v87, %v88
    %v117 = vadd.f32 %v115, %v116
    %118 = vst [vmem:[#allocation9] sm:$0xff] %v117
    // Predicated region
    $region30: #{tpu_custom_call.1} parent=1 // pred_check
      _
    $region31: #{tpu_custom_call.1} parent=1 // pred_check_branch
      %120 = sbr.rel (0) target = $region33
    $region32: #{tpu_custom_call.1} parent=1 // pred_region
      %s122 = ssub.s32 128, 128
      %123 = vsyncadd [#allocation4], %s122
      %s125 = sshll.u32 [#allocation8], 4
      %s126 = int_to_ptr.vmem [resolvable:$true] %s125
      %128 = dma.vmem_to_hbm [thread:$0]  %s126, 128, %s3, [#allocation4]
    $region33: #{tpu_custom_call.1} parent=1 // pred_fallthru
      _
    // Predicated region
    $region34: #{tpu_custom_call.1} parent=1 // pred_check
      _
    $region35: #{tpu_custom_call.1} parent=1 // pred_check_branch
      %130 = sbr.rel (0) target = $region37
    $region36: #{tpu_custom_call.1} parent=1 // pred_region
      %s132 = ssub.s32 128, 128
      %133 = vsyncadd [#allocation10], %s132
      %s135 = sshll.u32 [#allocation9], 4
      %s136 = int_to_ptr.vmem [resolvable:$true] %s135
      %138 = dma.vmem_to_hbm [thread:$0]  %s136, 128, %s4, [#allocation10]
    $region37: #{tpu_custom_call.1} parent=1 // pred_fallthru
      _
    // Predicated region
    $region38: #{tpu_custom_call.1} parent=1 // pred_check
      _
    $region39: #{tpu_custom_call.1} parent=1 // pred_check_branch
      %140 = sbr.rel (0) target = $region41
    $region40: #{tpu_custom_call.1} parent=1 // pred_region
      %141 = dma.done [#allocation4], 128
    $region41: #{tpu_custom_call.1} parent=1 // pred_fallthru
      _
    // Predicated region
    $region42: #{tpu_custom_call.1} parent=1 // pred_check
      _
    $region43: #{tpu_custom_call.1} parent=1 // pred_check_branch
      %143 = sbr.rel (0) target = $region45
    $region44: #{tpu_custom_call.1} parent=1 // pred_region
      %144 = dma.done [#allocation10], 128
    $region45: #{tpu_custom_call.1} parent=1 // pred_fallthru
      _
    %145 = vsyncpa [#allocation3], 1
    %146 = vsyncpa [#allocation6], 1
    %147 = vsyncpa [#allocation4], 1
    %148 = vsyncpa [#allocation10], 1

</llo_original>
